<compile_context>
chip_gen: v5e
topology: v5e:2x2
jax: 0.10.0
libtpu: 0.0.40
codegen_flags: <defaults>
</compile_context>

<pallas_src>
import functools

import jax
import jax.numpy as jnp
from jax.experimental import pallas as pl
from jax.experimental.pallas import tpu as pltpu


def _round_up(a: int, m: int) -> int:
    return ((a + m - 1) // m) * m


def _fit_tile(dim: int, tile: int, align: int) -> int:
    """Largest multiple of `align` <= `tile` that divides `dim` (dim % align == 0)."""
    tile = max(align, min(tile, dim))
    tile -= tile % align
    while dim % tile:
        tile -= align
    return tile


# ----------------------------------------------------------------------------
# Kernels
# ----------------------------------------------------------------------------
def _lr_small_kernel(x_ref, wt_ref, b_ref, o_ref):
    """Whole-problem kernel (no grid): o = x @ W.T + b with f32 accumulation."""
    acc = jnp.dot(x_ref[...], wt_ref[...], preferred_element_type=jnp.float32)
    o_ref[...] = (acc + b_ref[...].astype(jnp.float32)).astype(o_ref.dtype)


def _lr_tiled_kernel_single_k(x_ref, wt_ref, b_ref, o_ref):
    """One (tm, tn) output tile, full K in one block: no scratch needed."""
    acc = jnp.dot(x_ref[...], wt_ref[...], preferred_element_type=jnp.float32)
    o_ref[...] = (acc + b_ref[...].astype(jnp.float32)).astype(o_ref.dtype)


def _lr_tiled_kernel_ksplit(x_ref, wt_ref, b_ref, o_ref, acc_ref):
    """One (tm, tn) output tile, K streamed over grid axis 2.

    Bias is folded into the accumulator init (saves a finalize VPU pass).
    """
    k = pl.program_id(2)

    @pl.when(k == 0)
    def _():
        acc_ref[...] = jnp.broadcast_to(
            b_ref[...].astype(jnp.float32), acc_ref.shape
        )

    acc_ref[...] += jnp.dot(
        x_ref[...], wt_ref[...], preferred_element_type=jnp.float32
    )

    @pl.when(k == pl.num_programs(2) - 1)
    def _():
        o_ref[...] = acc_ref[...].astype(o_ref.dtype)


# ----------------------------------------------------------------------------
# Parameter packing (do once at parameter-load time, NOT per forward call)
# ----------------------------------------------------------------------------
def pack_lr_layer_params(w, b, *, param_dtype=None):
    """Pre-pack nn.Linear params: transpose W and pad to 128-multiples.

    Returns (wt_p, b_p, n): wt_p is (Dp, Np) = padded W.T (optionally cast to
    `param_dtype`, e.g. jnp.bfloat16), b_p is (1, Np) f32, n is the true output
    width.  Doing this once avoids re-reading and re-writing the weights in HBM
    on every forward call.
    """
    N, D = w.shape
    assert b.shape == (N,)
    Dp = _round_up(D, 128)
    Np = _round_up(N, 128)
    wt = w.T
    if param_dtype is not None:
        wt = wt.astype(param_dtype)
    wt_p = jnp.zeros((Dp, Np), wt.dtype).at[:D, :N].set(wt)
    b_p = jnp.zeros((1, Np), jnp.float32).at[0, :N].set(b.astype(jnp.float32))
    return wt_p, b_p, N


# ----------------------------------------------------------------------------
# Forward passes
# ----------------------------------------------------------------------------
@functools.partial(jax.jit, static_argnames=("n", "tm", "tn", "tk"))
def lr_layer_forward_packed(x, wt_p, b_p, *, n, tm=256, tn=512, tk=1024):
    """Tiled MXU forward using pre-packed params.  x: (B, D) -> (B, n)."""
    B, D = x.shape
    Dp, Np = wt_p.shape
    assert Dp >= D and Np >= n
    out_dtype = x.dtype

    # Cast activations to the packed-weight dtype (e.g. bf16) for the MXU;
    # accumulation stays f32 inside the kernel.
    if x.dtype != wt_p.dtype:
        x = x.astype(wt_p.dtype)

    # --- tile selection (only divisors of the padded dims; no over-padding) ---
    Bp = _round_up(B, 8)
    tm = _fit_tile(Bp, tm, 8)
    tn = _fit_tile(Np, tn, 128)
    k_split = Dp > tk
    tk = _fit_tile(Dp, tk, 128) if k_split else Dp

    # v7x megacore: make sure there is >1 block on a "parallel" axis.
    if (Bp // tm) == 1 and (Np // tn) == 1 and tn % 256 == 0:
        tn //= 2

    # Pad activations only when strictly required.
    if Bp != B or Dp != D:
        x = jnp.zeros((Bp, Dp), x.dtype).at[:B, :D].set(x)

    grid_m, grid_n, grid_k = Bp // tm, Np // tn, Dp // tk

    # Explicit VMEM budget (double-buffered inputs/outputs + accumulator),
    # capped at v7x's 64 MiB physical VMEM.
    isz = jnp.dtype(x.dtype).itemsize
    osz = jnp.dtype(out_dtype).itemsize
    est = (2 * (tm * tk + tk * tn) * isz + 2 * tn * 4
           + 2 * tm * tn * osz + (tm * tn * 4 if k_split else 0))
    vmem_limit = int(min(64 * 2**20, max(32 * 2**20, 2 * est)))

    if k_split:
        kernel = _lr_tiled_kernel_ksplit
        grid = (grid_m, grid_n, grid_k)
        in_specs = [
            pl.BlockSpec((tm, tk), lambda i, j, k: (i, k)),   # x tile
            pl.BlockSpec((tk, tn), lambda i, j, k: (k, j)),   # W.T tile
            pl.BlockSpec((1, tn), lambda i, j, k: (0, j)),    # bias tile
        ]
        out_spec = pl.BlockSpec((tm, tn), lambda i, j, k: (i, j))
        scratch = [pltpu.VMEM((tm, tn), jnp.float32)]
        dims = ("parallel", "parallel", "arbitrary")
    else:
        kernel = _lr_tiled_kernel_single_k
        grid = (grid_m, grid_n)
        in_specs = [
            pl.BlockSpec((tm, tk), lambda i, j: (i, 0)),
            pl.BlockSpec((tk, tn), lambda i, j: (0, j)),
            pl.BlockSpec((1, tn), lambda i, j: (0, j)),
        ]
        out_spec = pl.BlockSpec((tm, tn), lambda i, j: (i, j))
        scratch = []
        dims = ("parallel", "parallel")

    out_p = pl.pallas_call(
        kernel,
        out_shape=jax.ShapeDtypeStruct((Bp, Np), out_dtype),
        grid_spec=pltpu.PrefetchScalarGridSpec(
            num_scalar_prefetch=0,
            grid=grid,
            in_specs=in_specs,
            out_specs=out_spec,
            scratch_shapes=scratch,
        ),
        compiler_params=pltpu.CompilerParams(
            dimension_semantics=dims,
            vmem_limit_bytes=vmem_limit,
        ),
    )(x, wt_p, b_p)

    if Bp != B or Np != n:
        out_p = out_p[:B, :n]
    return out_p


def _lr_layer_forward_small(x, w, b):
    """Latency path for tiny problems: single no-grid kernel, no padding."""
    B, D = x.shape
    N = w.shape[0]
    return pl.pallas_call(
        _lr_small_kernel,
        out_shape=jax.ShapeDtypeStruct((B, N), x.dtype),
    )(x, w.T, b.reshape(1, N))


def _is_small_problem(B, D, N, itemsize):
    vmem_bytes = (B * D + N * D + B * N + N) * itemsize
    return vmem_bytes <= (2 << 20) and B <= 1024 and D <= 2048 and N <= 2048


@functools.partial(jax.jit, static_argnames=("tm", "tn", "tk", "compute_dtype"))
def lr_layer_forward(x, w, b, *, tm=256, tn=512, tk=1024, compute_dtype=None):
    """Convenience forward: x (B, D), w (N, D), b (N,) -> (B, N).

    For repeated calls at large D/N, prefer pack_lr_layer_params() once plus
    lr_layer_forward_packed(); packing here rewrites the weights every call.
    """
    B, D = x.shape
    N, D2 = w.shape
    assert D == D2 and b.shape == (N,)

    if _is_small_problem(B, D, N, jnp.dtype(x.dtype).itemsize):
        return _lr_layer_forward_small(x, w, b)

    wt_p, b_p, n = pack_lr_layer_params(w, b, param_dtype=compute_dtype)
    return lr_layer_forward_packed(x, wt_p, b_p, n=n, tm=tm, tn=tn, tk=tk)


def lr_layer_reference(x, w, b):
    """Pure-JAX reference mirroring LRLayer.forward (nn.Linear)."""
    return x @ w.T + b


# TODO(synk): clip() (in-place parameter clamp_(-1, 1), training-time only) is a
# host-side parameter utility, not forward compute — no Pallas kernel needed.


if __name__ == "__main__":
    key = jax.random.PRNGKey(0)

    # --- 1) Shipped small shape (batch=8, input_dim=32, n=16): small path. ---
    B, D, N = 8, 32, 16
    kx, kw, kb = jax.random.split(key, 3)
    x = jax.random.uniform(kx, (B, D), jnp.float32, minval=-1.0, maxval=1.0)
    bound = 1.0 / (D ** 0.5)
    w = jax.random.uniform(kw, (N, D), jnp.float32, minval=-bound, maxval=bound)
    b = jax.random.uniform(kb, (N,), jnp.float32, minval=-bound, maxval=bound)

    out = jax.block_until_ready(lr_layer_forward(x, w, b))
    ref = lr_layer_reference(x, w, b)
    assert out.shape == (B, N)
    assert jnp.allclose(out, ref, atol=1e-5, rtol=1e-5), "small-path mismatch"

    # --- 2) Tiled path with pre-packed params (exercises K-split + N pad). ---
    B2, D2, N2 = 200, 384, 200
    kx2, kw2, kb2 = jax.random.split(jax.random.PRNGKey(1), 3)
    x2 = jax.random.uniform(kx2, (B2, D2), jnp.float32, minval=-1.0, maxval=1.0)
    bnd2 = 1.0 / (D2 ** 0.5)
    w2 = jax.random.uniform(kw2, (N2, D2), jnp.float32, minval=-bnd2, maxval=bnd2)
    b2 = jax.random.uniform(kb2, (N2,), jnp.float32, minval=-bnd2, maxval=bnd2)
    ref2 = lr_layer_reference(x2, w2, b2)

    wt_p, b_p, n2 = pack_lr_layer_params(w2, b2)          # pack once
    # K-split kernel (small tiles force a 3-step K stream + bias-in-init).
    out2a = jax.block_until_ready(
        lr_layer_forward_packed(x2, wt_p, b_p, n=n2, tm=128, tn=128, tk=128))
    assert out2a.shape == (B2, N2)
    assert jnp.allclose(out2a, ref2, atol=1e-4, rtol=1e-4), "k-split mismatch"
    # Single-K kernel (default tiles: whole D in one block, no scratch).
    out2b = jax.block_until_ready(
        lr_layer_forward_packed(x2, wt_p, b_p, n=n2))
    assert jnp.allclose(out2b, ref2, atol=1e-4, rtol=1e-4), "single-K mismatch"

    # --- 3) bf16 compute path (weights packed bf16, f32 accumulation). ---
    wt_bf, b_bf, _ = pack_lr_layer_params(w2, b2, param_dtype=jnp.bfloat16)
    out3 = jax.block_until_ready(
        lr_layer_forward_packed(x2, wt_bf, b_bf, n=n2))
    assert out3.dtype == jnp.float32
    assert jnp.allclose(out3, ref2, atol=5e-2, rtol=5e-2), "bf16 path mismatch"

    print("KERNEL_OK")
</pallas_src>

<mosaic_0001>
module attributes {stable_mosaic.version = 11 : i64} {
  func.func @_lr_small_kernel(%arg0: memref<8x32xf32, #tpu.memory_space<vmem>>, %arg1: memref<32x16xf32, #tpu.memory_space<vmem>>, %arg2: memref<1x16xf32, #tpu.memory_space<vmem>>, %arg3: memref<8x16xf32, #tpu.memory_space<vmem>>) attributes {dimension_semantics = [], scalar_prefetch = 0 : i64, scratch_operands = 0 : i64, tpu.core_type = #tpu.core_type<tc>} {
    %c0 = arith.constant 0 : index
    %c0_0 = arith.constant 0 : index
    %0 = vector.load %arg0[%c0, %c0_0] : memref<8x32xf32, #tpu.memory_space<vmem>>, vector<8x32xf32>
    %c0_1 = arith.constant 0 : index
    %c0_2 = arith.constant 0 : index
    %1 = vector.load %arg1[%c0_1, %c0_2] : memref<32x16xf32, #tpu.memory_space<vmem>>, vector<32x16xf32>
    %cst = arith.constant dense<0.000000e+00> : vector<8x16xf32>
    %2 = tpu.matmul %0, %1, %cst {dimension_numbers = #tpu.dot_dimension_numbers<[1], [0], [0], [1], [0, 0, 1, 1], [], []>} : vector<8x32xf32>, vector<32x16xf32>, vector<8x16xf32> -> vector<8x16xf32>
    %c0_3 = arith.constant 0 : index
    %c0_4 = arith.constant 0 : index
    %3 = vector.load %arg2[%c0_3, %c0_4] : memref<1x16xf32, #tpu.memory_space<vmem>>, vector<1x16xf32>
    %4 = vector.broadcast %3 : vector<1x16xf32> to vector<8x16xf32>
    %5 = arith.addf %2, %4 : vector<8x16xf32>
    %c0_5 = arith.constant 0 : index
    %c0_6 = arith.constant 0 : index
    %6 = vector.load %arg3[%c0_5, %c0_6] : memref<8x16xf32, #tpu.memory_space<vmem>>, vector<8x16xf32>
    tpu.vector_store %arg3[%c0_5, %c0_6], %5 {strides = array<i32>} : memref<8x16xf32, #tpu.memory_space<vmem>>, vector<8x16xf32>,
    return
  }
}

</mosaic_0001>

<llo_original>
// kernel: lr_layer_forward.1
$region0: #{lr_layer_forward.1}
  #allocation0 [shape = 'u32[]', space=smem, size = 0x4, offset = 0x4, fixed_abs, tag = 'smem constant byte address 0x4 - core index']
  #allocation1 [shape = 'u32[72,128]{1,0:T(1,128)}', space=vmem, size = 0x9000, scoped, tag = 'internal scratch']
  %s0 = inlined_call_operand.vmem [shape: f32[8,32], index: 0, kind: input, shape index: {}]
  %s1 = inlined_call_operand.vmem [shape: f32[32,16], index: 1, kind: input, shape index: {}]
  %s2 = inlined_call_operand.vmem [shape: f32[1,16], index: 2, kind: input, shape index: {}]
  %s3 = inlined_call_operand.hbm [shape: f32[8,16], index: 3, kind: output, shape index: {}]
  %s4 = sld [smem:[#allocation0]]
  $region22: #{lr_layer_forward.1} parent=0
    _
  %s6 = ssub.s32 1, %s4
  %s7 = scalar_select 0, %s6, %s4
  $region1: #{lr_layer_forward.1} parent=0
    #allocation2 [shape = 'u8[4096]{0}', space=vmem, size = 0x1000, scoped, tag = 'output window, operand 0, single buffered']
    #allocation3 [shape = 's32[1]{0}', space=sflag, size = 0x4, scoped, tag = 'scoped memory for lr_layer_forward.1']
    %8 = vsyncpa [#allocation3], 0
    // Predicated region
    $region2: #{lr_layer_forward.1} parent=1 // pred_check
      _
    $region3: #{lr_layer_forward.1} parent=1 // pred_check_branch
      %10 = sbr.rel (0) target = $region5
    $region4: #{lr_layer_forward.1} parent=1 // pred_region
      _
    $region5: #{lr_layer_forward.1} parent=1 // pred_fallthru
      _
    // Predicated region
    $region6: #{lr_layer_forward.1} parent=1 // pred_check
      _
    $region7: #{lr_layer_forward.1} parent=1 // pred_check_branch
      %12 = sbr.rel (0) target = $region9
    $region8: #{lr_layer_forward.1} parent=1 // pred_region
      _
    $region9: #{lr_layer_forward.1} parent=1 // pred_fallthru
      _
    // Predicated region
    $region10: #{lr_layer_forward.1} parent=1 // pred_check
      _
    $region11: #{lr_layer_forward.1} parent=1 // pred_check_branch
      %14 = sbr.rel (0) target = $region13
    $region12: #{lr_layer_forward.1} parent=1 // pred_region
      _
    $region13: #{lr_layer_forward.1} parent=1 // pred_fallthru
      _
    %v15 = vld [vmem:[%s0] sm:$0xff]
    %v16 = vld [vmem:[%s1] sm:$0xff]
    %v17 = vld [vmem:[%s1 + $0x8] sm:$0xff]
    %v18 = vld [vmem:[%s1 + $0x10] sm:$0xff]
    %v19 = vld [vmem:[%s1 + $0x18] sm:$0xff]
    %v20 = vld [vmem:[%s2] sm:$0x1]
    %v22 = vperm.slane %v20, 0
    %vm24 = vcmask 261120
    %v26 = vsel %vm24, %v15, 0
    %28 = vmatpush.msra.mxu0 0.0
    %29 = vmatpush.msra.mxu0 0.0
    %30 = vmatpush.msra.mxu0 0.0
    %31 = vmatpush.msra.mxu0 0.0
    %32 = vmatpush.msra.mxu0 0.0
    %33 = vmatpush.msra.mxu0 0.0
    %34 = vmatpush.msra.mxu0 0.0
    %35 = vmatpush.msra.mxu0 0.0
    %36 = vmatpush.msra.mxu0 0.0
    %37 = vmatpush.msra.mxu0 0.0
    %38 = vmatpush.msra.mxu0 0.0
    %39 = vmatpush.msra.mxu0 0.0
    %40 = vmatpush.msra.mxu0 %v19
    %41 = vmatpush.msra.mxu0 %v18
    %42 = vmatpush.msra.mxu0 %v17
    %43 = vmatpush.msra.mxu0 %v16
    %44 = vmatmul.f32.gmra.mxu0 %v26
    %v45 = vpop.f32.mrf.mxu0
    %v46 = vadd.f32 %v22, %v45
    %47 = vdwg.mxu0
    %vm48 = vcmask 130048
    %49 = vst.msk [vmem:[#allocation2] sm:$0xff] %vm48, %v46
    // Predicated region
    $region14: #{lr_layer_forward.1} parent=1 // pred_check
      _
    $region15: #{lr_layer_forward.1} parent=1 // pred_check_branch
      %51 = sbr.rel (0) target = $region17
    $region16: #{lr_layer_forward.1} parent=1 // pred_region
      %53 = vsyncadd [#allocation3], 0
      %s55 = sshll.u32 [#allocation2], 4
      %s56 = int_to_ptr.vmem [resolvable:$true] %s55
      %s57 = sshll.u32 %s3, 4
      %s58 = int_to_ptr.hbm [resolvable:$true] %s57
      %60 = dma.vmem_to_hbm [thread:$0]  %s56, 128, %s58, [#allocation3]
    $region17: #{lr_layer_forward.1} parent=1 // pred_fallthru
      _
    // Predicated region
    $region18: #{lr_layer_forward.1} parent=1 // pred_check
      _
    $region19: #{lr_layer_forward.1} parent=1 // pred_check_branch
      %62 = sbr.rel (0) target = $region21
    $region20: #{lr_layer_forward.1} parent=1 // pred_region
      %64 = dma.done [#allocation3], 128
    $region21: #{lr_layer_forward.1} parent=1 // pred_fallthru
      _
    %65 = vsyncpa [#allocation3], 1

</llo_original>
